<compile_context>
chip_gen: v7x
topology: tpu7x:2x2x1
jax: 0.10.0
libtpu: 0.0.40
codegen_flags: <defaults>
</compile_context>

<pallas_src>
import functools

import jax
import jax.numpy as jnp
from jax.experimental import pallas as pl
from jax.experimental.pallas import tpu as pltpu

_NEG = -1e30  # pushes masked scores far below any hinge threshold


def _contrastive_loss_kernel(im_ref, s_ref, dcol_ref, drow_ref, *refs,
                             block, batch, num_blocks, padded, max_violation,
                             s_resident):
    if max_violation:
        out_row_ref, out_col_ref, msk_ref = refs
    else:
        out_row_ref, msk_ref = refs

    i = pl.program_id(0)   # row block (parallel)
    j = pl.program_id(1)   # col block (inner, arbitrary)
    T = block

    @pl.when(j == 0)
    def _init():
        out_row_ref[...] = jnp.zeros_like(out_row_ref)

    if s_resident:
        s_blk = s_ref[pl.ds(pl.multiple_of(j * T, T), T), :]
    else:
        s_blk = s_ref[...]

    # (T, T) scores block = im_blk @ s_blk.T, bf16 inputs, f32 accumulation.
    scores = jax.lax.dot_general(
        im_ref[...], s_blk,
        dimension_numbers=(((1,), (1,)), ((), ())),
        preferred_element_type=jnp.float32,
    )

    # Exact masking of positive pairs (diagonal) and padded rows/cols, paid
    # only on tiles that actually contain such entries (gated with pl.when).
    need_mask = i == j
    if padded:
        need_mask = jnp.logical_or(
            need_mask,
            jnp.logical_or(i == num_blocks - 1, j == num_blocks - 1))

    @pl.when(need_mask)
    def _mask():
        r = jax.lax.broadcasted_iota(jnp.int32, (T, T), 0) + i * T
        c = jax.lax.broadcasted_iota(jnp.int32, (T, T), 1) + j * T
        cond = r == c
        if padded:
            cond = jnp.logical_or(cond,
                                  jnp.logical_or(r >= batch, c >= batch))
        msk_ref[...] = jnp.where(cond, _NEG, scores)

    @pl.when(jnp.logical_not(need_mask))
    def _copy():
        msk_ref[...] = scores

    sc = msk_ref[...]

    # Margin is already folded into the diagonals (diag - margin).
    dcol = dcol_ref[pl.ds(pl.multiple_of(i * T, T), T), :]   # (T, 1)
    drow = drow_ref[:, pl.ds(pl.multiple_of(j * T, T), T)]   # (1, T)

    cost_s = jnp.maximum(sc - dcol, 0.0)    # caption-retrieval hinge
    cost_im = jnp.maximum(sc - drow, 0.0)   # image-retrieval hinge

    if max_violation:
        rmax = jnp.max(cost_s, axis=1, keepdims=True)    # (T, 1)
        cmax = jnp.max(cost_im, axis=0, keepdims=True)   # (1, T)
        out_row_ref[...] = jnp.maximum(
            out_row_ref[...], jnp.broadcast_to(rmax, out_row_ref.shape))
        out_col_ref[...] = jnp.broadcast_to(cmax, out_col_ref.shape)
    else:
        row_part = jnp.sum(cost_s + cost_im, axis=1, keepdims=True)  # (T, 1)
        out_row_ref[...] += jnp.broadcast_to(row_part, out_row_ref.shape)


def _pick_block(batch, block_size=None):
    if block_size is not None:
        bs = int(block_size)
        if bs <= 0 or bs % 128 != 0:
            raise ValueError("block_size must be a positive multiple of 128")
        return bs
    b128 = ((batch + 127) // 128) * 128
    # T=256 when it keeps >=2 row blocks (megacore); T=512 is worth trying on
    # v5e/v6e via block_size= when B is large and VMEM allows.
    if b128 >= 512 and b128 % 256 == 0:
        return 256
    return 128


def contrastive_loss(im, s, margin=0.2, max_violation=False, block_size=None,
                     mxu_dtype=jnp.bfloat16):
    """Pallas equivalent of ContrastiveLoss.forward(im, s) -> scalar loss."""
    assert im.ndim == 2 and s.ndim == 2 and im.shape == s.shape
    B, D = im.shape
    T = _pick_block(B, block_size)
    B_pad = ((B + T - 1) // T) * T
    nb = B_pad // T
    padded = B_pad != B

    im_c = im.astype(mxu_dtype)
    s_c = s.astype(mxu_dtype)

    # Diagonal <im_i, s_i> from the SAME cast inputs the MXU sees (avoids a
    # second f32 HBM read and matches the matmul's input precision).
    diag = jnp.sum(im_c.astype(jnp.float32) * s_c.astype(jnp.float32), axis=-1)
    dm = diag - jnp.float32(margin)          # margin folded into the diagonal

    if padded:
        pr = B_pad - B
        im_c = jnp.pad(im_c, ((0, pr), (0, 0)))
        s_c = jnp.pad(s_c, ((0, pr), (0, 0)))
        dm = jnp.pad(dm, (0, pr))            # padded diag value is irrelevant
    dcol = dm.reshape(B_pad, 1)
    drow = dm.reshape(1, B_pad)

    itemsize = jnp.dtype(mxu_dtype).itemsize
    s_resident = (B_pad * D * itemsize) <= 8 * 1024 * 1024   # v7x-safe margin

    kernel = functools.partial(
        _contrastive_loss_kernel, block=T, batch=B, num_blocks=nb,
        padded=padded, max_violation=bool(max_violation),
        s_resident=s_resident)

    if s_resident:
        s_spec = pl.BlockSpec((B_pad, D), lambda i, j: (0, 0))
    else:
        # Streamed fallback for very large s: deeper buffering hides DMA jitter.
        s_spec = pl.BlockSpec((T, D), lambda i, j: (j, 0),
                              pipeline_mode=pl.Buffered(3))

    in_specs = [
        pl.BlockSpec((T, D), lambda i, j: (i, 0)),        # im row block
        s_spec,                                           # s (resident)
        pl.BlockSpec((B_pad, 1), lambda i, j: (0, 0)),    # diag - margin (col)
        pl.BlockSpec((1, B_pad), lambda i, j: (0, 0)),    # diag - margin (row)
    ]

    out_row_shape = jax.ShapeDtypeStruct((B_pad, 128), jnp.float32)
    out_row_spec = pl.BlockSpec((T, 128), lambda i, j: (i, 0))
    scratch = [pltpu.VMEM((T, T), jnp.float32)]

    if max_violation:
        out_shape = (out_row_shape,
                     jax.ShapeDtypeStruct((nb * 8, B_pad), jnp.float32))
        out_specs = (out_row_spec,
                     pl.BlockSpec((8, T), lambda i, j: (i, j)))
    else:
        out_shape = out_row_shape
        out_specs = out_row_spec

    s_factor = 1 if s_resident else nb
    bytes_accessed = (B_pad * D * itemsize * (1 + s_factor)   # im + s
                      + 2 * B_pad * 4                          # diagonals
                      + B_pad * 128 * 4                        # row output
                      + (nb * 8 * B_pad * 4 if max_violation else 0))
    cost = pl.CostEstimate(flops=2 * B_pad * B_pad * D,
                           transcendentals=0,
                           bytes_accessed=bytes_accessed)

    outs = pl.pallas_call(
        kernel,
        out_shape=out_shape,
        grid_spec=pltpu.PrefetchScalarGridSpec(
            num_scalar_prefetch=0,
            grid=(nb, nb),
            in_specs=in_specs,
            out_specs=out_specs,
            scratch_shapes=scratch,
        ),
        compiler_params=pltpu.CompilerParams(
            dimension_semantics=("parallel", "arbitrary")),
        cost_estimate=cost,
    )(im_c, s_c, dcol, drow)

    if max_violation:
        out_row, out_col = outs
        # sum_i max_j cost_s  +  sum_j max_i cost_im  (tiny wrapper reduction)
        return jnp.sum(out_row[:, 0]) + jnp.sum(jnp.max(out_col, axis=0))
    return jnp.sum(outs[:, 0])


def _reference_loss(im, s, margin=0.2, max_violation=False):
    im32 = im.astype(jnp.float32)
    s32 = s.astype(jnp.float32)
    scores = jnp.matmul(im32, s32.T, precision=jax.lax.Precision.HIGHEST)
    diag = jnp.diag(scores)
    cost_s = jnp.maximum(margin + scores - diag[:, None], 0.0)
    cost_im = jnp.maximum(margin + scores - diag[None, :], 0.0)
    eye = jnp.eye(scores.shape[0], dtype=bool)
    cost_s = jnp.where(eye, 0.0, cost_s)
    cost_im = jnp.where(eye, 0.0, cost_im)
    if max_violation:
        return jnp.sum(jnp.max(cost_s, axis=1)) + jnp.sum(jnp.max(cost_im, axis=0))
    return jnp.sum(cost_s) + jnp.sum(cost_im)


if __name__ == "__main__":
    key = jax.random.PRNGKey(0)

    configs = [
        # (B, D, block_size):
        #   256/128 -> clean 2x2 grid (diag + off-diag tiles), resident s
        #   200/128 -> 2x2 grid with padded rows/cols (boundary masking path)
        #   8/None  -> tiny batch, single padded 128 block
        (256, 64, 128),
        (200, 48, 128),
        (8, 32, None),
    ]
    for (B, D, blk) in configs:
        k_im, k_s = jax.random.split(jax.random.fold_in(key, B))
        im = jax.random.normal(k_im, (B, D), dtype=jnp.float32)
        s = jax.random.normal(k_s, (B, D), dtype=jnp.float32)
        for mv in (False, True):
            loss = jax.block_until_ready(
                contrastive_loss(im, s, margin=0.2, max_violation=mv,
                                 block_size=blk))
            ref = _reference_loss(im, s, margin=0.2, max_violation=mv)
            # bf16 MXU path vs f32 HIGHEST reference -> modest tolerance.
            assert jnp.allclose(loss, ref, rtol=3e-3, atol=1.0), (
                B, D, mv, float(loss), float(ref))

    print("KERNEL_OK")
</pallas_src>

<mosaic_0001>
module attributes {stable_mosaic.version = 11 : i64} {
  func.func @_contrastive_loss_kernel(%arg0: i32, %arg1: i32, %arg2: memref<128x64xbf16, #tpu.memory_space<vmem>>, %arg3: memref<256x64xbf16, #tpu.memory_space<vmem>>, %arg4: memref<256x1xf32, #tpu.memory_space<vmem>>, %arg5: memref<1x256xf32, #tpu.memory_space<vmem>>, %arg6: memref<128x128xf32, #tpu.memory_space<vmem>>, %arg7: memref<128x128xf32, #tpu.memory_space<vmem>>) attributes {dimension_semantics = [#tpu.dimension_semantics<parallel>, #tpu.dimension_semantics<arbitrary>], iteration_bounds = array<i64: 2, 2>, scalar_prefetch = 0 : i64, scratch_operands = 1 : i64, tpu.core_type = #tpu.core_type<tc>, window_params = [{transform_indices = @transform_0, window_bounds = array<i64: 128, 64>}, {pipeline_mode = #tpu.pipeline_mode<synchronous>, transform_indices = @transform_1, window_bounds = array<i64: 256, 64>}, {pipeline_mode = #tpu.pipeline_mode<synchronous>, transform_indices = @transform_2, window_bounds = array<i64: 256, 1>}, {pipeline_mode = #tpu.pipeline_mode<synchronous>, transform_indices = @transform_3, window_bounds = array<i64: 1, 256>}, {transform_indices = @transform_4, window_bounds = array<i64: 128, 128>}]} {
    %c0_i32 = arith.constant 0 : i32
    %0 = arith.cmpi eq, %arg1, %c0_i32 : i32
    %1 = arith.extui %0 : i1 to i32
    %c0_i32_0 = arith.constant 0 : i32
    %2 = arith.cmpi ne, %1, %c0_i32_0 : i32
    scf.if %2 {
      %cst_18 = arith.constant 0.000000e+00 : f32
      %40 = vector.broadcast %cst_18 : f32 to vector<128x128xf32>
      %c0_19 = arith.constant 0 : index
      %c0_20 = arith.constant 0 : index
      %41 = vector.load %arg6[%c0_19, %c0_20] : memref<128x128xf32, #tpu.memory_space<vmem>>, vector<128x128xf32>
      tpu.vector_store %arg6[%c0_19, %c0_20], %40 {strides = array<i32>} : memref<128x128xf32, #tpu.memory_space<vmem>>, vector<128x128xf32>,
    } else {
    }
    %c128_i32 = arith.constant 128 : i32
    %3 = arith.muli %arg1, %c128_i32 : i32
    %4 = tpu.assume_multiple %3, 128 : i32
    %5 = arith.index_cast %4 : i32 to index
    %c0 = arith.constant 0 : index
    %6 = vector.load %arg3[%5, %c0] : memref<256x64xbf16, #tpu.memory_space<vmem>>, vector<128x64xbf16>
    %c0_1 = arith.constant 0 : index
    %c0_2 = arith.constant 0 : index
    %7 = vector.load %arg2[%c0_1, %c0_2] : memref<128x64xbf16, #tpu.memory_space<vmem>>, vector<128x64xbf16>
    %cst = arith.constant dense<0.000000e+00> : vector<128x128xf32>
    %8 = tpu.matmul %7, %6, %cst {dimension_numbers = #tpu.dot_dimension_numbers<[1], [1], [0], [0], [0, 0, 1, 0], [], []>} : vector<128x64xbf16>, vector<128x64xbf16>, vector<128x128xf32> -> vector<128x128xf32>
    %9 = arith.cmpi eq, %arg0, %arg1 : i32
    %10 = arith.extui %9 : i1 to i32
    %c0_i32_3 = arith.constant 0 : i32
    %11 = arith.cmpi ne, %10, %c0_i32_3 : i32
    scf.if %11 {
      %40 = tpu.iota {dimensions = array<i32: 0>} : vector<128x128xi32>
      %c128_i32_18 = arith.constant 128 : i32
      %41 = arith.muli %arg0, %c128_i32_18 : i32
      %42 = vector.broadcast %41 : i32 to vector<128x128xi32>
      %43 = arith.addi %40, %42 : vector<128x128xi32>
      %44 = tpu.iota {dimensions = array<i32: 1>} : vector<128x128xi32>
      %c128_i32_19 = arith.constant 128 : i32
      %45 = arith.muli %arg1, %c128_i32_19 : i32
      %46 = vector.broadcast %45 : i32 to vector<128x128xi32>
      %47 = arith.addi %44, %46 : vector<128x128xi32>
      %48 = arith.cmpi eq, %43, %47 : vector<128x128xi32>
      %cst_20 = arith.constant -1.000000e+30 : f32
      %49 = vector.broadcast %cst_20 : f32 to vector<128x128xf32>
      %50 = arith.select %48, %49, %8 : vector<128x128xi1>, vector<128x128xf32>
      %c0_21 = arith.constant 0 : index
      %c0_22 = arith.constant 0 : index
      %51 = vector.load %arg7[%c0_21, %c0_22] : memref<128x128xf32, #tpu.memory_space<vmem>>, vector<128x128xf32>
      tpu.vector_store %arg7[%c0_21, %c0_22], %50 {strides = array<i32>} : memref<128x128xf32, #tpu.memory_space<vmem>>, vector<128x128xf32>,
    } else {
    }
    %true = arith.constant true
    %12 = arith.xori %9, %true : i1
    %13 = arith.extui %12 : i1 to i32
    %c0_i32_4 = arith.constant 0 : i32
    %14 = arith.cmpi ne, %13, %c0_i32_4 : i32
    scf.if %14 {
      %c0_18 = arith.constant 0 : index
      %c0_19 = arith.constant 0 : index
      %40 = vector.load %arg7[%c0_18, %c0_19] : memref<128x128xf32, #tpu.memory_space<vmem>>, vector<128x128xf32>
      tpu.vector_store %arg7[%c0_18, %c0_19], %8 {strides = array<i32>} : memref<128x128xf32, #tpu.memory_space<vmem>>, vector<128x128xf32>,
    } else {
    }
    %c0_5 = arith.constant 0 : index
    %c0_6 = arith.constant 0 : index
    %15 = vector.load %arg7[%c0_5, %c0_6] : memref<128x128xf32, #tpu.memory_space<vmem>>, vector<128x128xf32>
    %c128_i32_7 = arith.constant 128 : i32
    %16 = arith.muli %arg0, %c128_i32_7 : i32
    %17 = tpu.assume_multiple %16, 128 : i32
    %18 = arith.index_cast %17 : i32 to index
    %c0_8 = arith.constant 0 : index
    %19 = vector.load %arg4[%18, %c0_8] : memref<256x1xf32, #tpu.memory_space<vmem>>, vector<128x1xf32>
    %c128_i32_9 = arith.constant 128 : i32
    %20 = arith.muli %arg1, %c128_i32_9 : i32
    %21 = tpu.assume_multiple %20, 128 : i32
    %c0_10 = arith.constant 0 : index
    %22 = arith.index_cast %21 : i32 to index
    %23 = vector.load %arg5[%c0_10, %22] : memref<1x256xf32, #tpu.memory_space<vmem>>, vector<1x128xf32>
    %24 = vector.broadcast %19 : vector<128x1xf32> to vector<128x128xf32>
    %25 = arith.subf %15, %24 : vector<128x128xf32>
    %cst_11 = arith.constant 0.000000e+00 : f32
    %26 = vector.broadcast %cst_11 : f32 to vector<128x128xf32>
    %27 = arith.maximumf %25, %26 : vector<128x128xf32>
    %28 = vector.broadcast %23 : vector<1x128xf32> to vector<128x128xf32>
    %29 = arith.subf %15, %28 : vector<128x128xf32>
    %cst_12 = arith.constant 0.000000e+00 : f32
    %30 = vector.broadcast %cst_12 : f32 to vector<128x128xf32>
    %31 = arith.maximumf %29, %30 : vector<128x128xf32>
    %32 = arith.addf %27, %31 : vector<128x128xf32>
    %cst_13 = arith.constant dense<0.000000e+00> : vector<128xf32>
    %33 = vector.multi_reduction <add>, %32, %cst_13 [1] : vector<128x128xf32> to vector<128xf32>
    %34 = vector.shape_cast %33 : vector<128xf32> to vector<128x1xf32>
    %c0_14 = arith.constant 0 : index
    %c0_15 = arith.constant 0 : index
    %35 = vector.load %arg6[%c0_14, %c0_15] : memref<128x128xf32, #tpu.memory_space<vmem>>, vector<128x128xf32>
    %36 = vector.shape_cast %34 : vector<128x1xf32> to vector<128x1xf32>
    %37 = vector.broadcast %36 : vector<128x1xf32> to vector<128x128xf32>
    %38 = arith.addf %35, %37 : vector<128x128xf32>
    %c0_16 = arith.constant 0 : index
    %c0_17 = arith.constant 0 : index
    %39 = vector.load %arg6[%c0_16, %c0_17] : memref<128x128xf32, #tpu.memory_space<vmem>>, vector<128x128xf32>
    tpu.vector_store %arg6[%c0_16, %c0_17], %38 {strides = array<i32>} : memref<128x128xf32, #tpu.memory_space<vmem>>, vector<128x128xf32>,
    return
  }
  func.func @transform_0(%arg0: i32, %arg1: i32) -> (i32, i32) {
    %c0_i32 = arith.constant 0 : i32
    %c0_i32_0 = arith.constant 0 : i32
    return %arg0, %c0_i32 : i32, i32
  }
  func.func @transform_1(%arg0: i32, %arg1: i32) -> (i32, i32) {
    %c0_i32 = arith.constant 0 : i32
    %c0_i32_0 = arith.constant 0 : i32
    %c0_i32_1 = arith.constant 0 : i32
    return %c0_i32, %c0_i32_0 : i32, i32
  }
  func.func @transform_2(%arg0: i32, %arg1: i32) -> (i32, i32) {
    %c0_i32 = arith.constant 0 : i32
    %c0_i32_0 = arith.constant 0 : i32
    %c0_i32_1 = arith.constant 0 : i32
    return %c0_i32, %c0_i32_0 : i32, i32
  }
  func.func @transform_3(%arg0: i32, %arg1: i32) -> (i32, i32) {
    %c0_i32 = arith.constant 0 : i32
    %c0_i32_0 = arith.constant 0 : i32
    %c0_i32_1 = arith.constant 0 : i32
    return %c0_i32, %c0_i32_0 : i32, i32
  }
  func.func @transform_4(%arg0: i32, %arg1: i32) -> (i32, i32) {
    %c0_i32 = arith.constant 0 : i32
    %c0_i32_0 = arith.constant 0 : i32
    return %arg0, %c0_i32 : i32, i32
  }
}

</mosaic_0001>

<llo_original>
// kernel: tpu_custom_call.1
$region0: #{tpu_custom_call.1}
  #allocation0 [shape = 'u32[]', space=smem, size = 0x4, offset = 0x4, fixed_abs, tag = 'smem constant byte address 0x4 - core index']
  #allocation1 [shape = 'u32[144,128]{1,0:T(1,128)}', space=vmem, size = 0x12000, scoped, tag = 'internal scratch']
  #allocation2 [shape = 'f32[128,128]{1,0:T(8,128)}', space=vmem, size = 0x10000, scoped, tag = 'scratch operand']
  %s0 = inlined_call_operand.vmem [shape: bf16[256,64], index: 0, kind: input, shape index: {}]
  %s1 = inlined_call_operand.vmem [shape: bf16[256,64], index: 1, kind: input, shape index: {}]
  %s2 = inlined_call_operand.vmem [shape: f32[256,1], index: 2, kind: input, shape index: {}]
  %s3 = inlined_call_operand.vmem [shape: f32[1,256], index: 3, kind: input, shape index: {}]
  %s4 = inlined_call_operand.hbm [shape: f32[256,128], index: 4, kind: output, shape index: {}]
  %s5 = sld [smem:[#allocation0]]
  $region61: #{tpu_custom_call.1} parent=0
    _
  %s7 = ssub.s32 1, %s5
  %s8 = scalar_select 0, %s7, %s5
  $region1: #{tpu_custom_call.1} parent=0
    #allocation3 [shape = 'u8[131072]{0}', space=vmem, size = 0x20000, scoped, tag = 'output window, operand 0']
    #allocation4 [shape = 's32[2]{0}', space=sflag, size = 0x8, scoped, tag = 'scoped memory for tpu_custom_call.1']
    %9 = vsyncpa [#allocation4], 0
    %s10 = scalar_lea.sflag [#allocation4], 1
    %11 = vsyncpa %s10, 0
    loop: start=0, step=1, limit=6
    $region2: #{tpu_custom_call.1} parent=1 // loop_pre_header
      _
    $region3: #{tpu_custom_call.1} parent=1 // loop_header
      %s13 = sphi 0, %s17
      %p14 = scmp.ge.s32.totalorder %s13, 6
      %s20 = sphi 0, %s32
      %s21 = sphi 0, %s28
      %s22 = sphi 0, %s20
      %s23 = sphi 0, %s21
      %s24 = sphi 0, %s22
      %s25 = sphi 0, %s23
      %s35 = sphi 0, %s37
      %s38 = sphi 0, %s35
      %s39 = sphi 0, %s38
      %s55 = sphi 0, %s39
      %s59 = sphi 0, %s59
      %s61 = sphi 0, %s59
      %s62 = sphi 0, %s61
      %s76 = sphi 0, %s62
      %s80 = sphi 0, %s80
      %s82 = sphi 0, %s80
      %s83 = sphi 0, %s82
      %s97 = sphi 0, %s83
      %s101 = sphi 0, %s101
      %s103 = sphi 0, %s101
      %s104 = sphi 0, %s103
      %s118 = sphi 0, %s104
      %s124 = sphi 0, %s126
      %s127 = sphi 0, %s124
      %s128 = sphi 0, %s127
      %s144 = sphi 0, %s128
    $region4: #{tpu_custom_call.1} parent=1 // loop_header_branch
      %16 = sbr.rel (%p14) target = $region8
    $region5: #{tpu_custom_call.1} parent=1 // loop_body
      %s18 = ssub.s32 %s13, 1
      %s19 = ssub.s32 %s13, 2
      %s26 = sadd.s32 1, %s21
      %p27 = scmp.ge.s32.totalorder %s26, 2
      %s28 = scalar_select %p27, 0, %s26
      %s29 = sadd.s32 1, %s20
      %s30 = scalar_select %p27, %s29, %s20
      %p31 = scmp.ge.s32.totalorder %s30, 2
      %s32 = scalar_select %p31, 0, %s30
      %s33 = ssub.s32 %s20, %s32
      %p34 = scmp.eq.s32.totalorder %s33, 0
      %s36 = sadd.s32 %s35, 1
      %s37 = scalar_select %p34, %s35, %s36
      %p40 = pneg %p34
      %p41 = scmp.eq.s32.totalorder %s13, 3
      %p42 = por %p40, %p41
      %p43 = scmp.ne.s32.totalorder %s35, %s38
      %p44 = scmp.eq.s32.totalorder %s13, 0
      %p45 = por %p43, %p44
      %p46 = scmp.ne.s32.totalorder %s35, %s38
      %p47 = scmp.eq.s32.totalorder %s18, 3
      %p48 = por %p46, %p47
      %p49 = scmp.ne.s32.totalorder %s38, %s39
      %p50 = scmp.eq.s32.totalorder %s18, 0
      %p51 = por %p49, %p50
      %p52 = scmp.ne.s32.totalorder %s38, %s39
      %p53 = scmp.eq.s32.totalorder %s19, 3
      %p54 = por %p52, %p53
      %p56 = scmp.ne.s32.totalorder %s39, %s55
      %p57 = scmp.eq.s32.totalorder %s19, 0
      %p58 = por %p56, %p57
      %s60 = sadd.s32 %s59, 1
      %p63 = scmp.eq.s32.totalorder %s13, 3
      %p64 = scmp.ne.s32.totalorder %s59, %s61
      %p65 = scmp.eq.s32.totalorder %s13, 0
      %p66 = por %p64, %p65
      %p67 = scmp.ne.s32.totalorder %s59, %s61
      %p68 = scmp.eq.s32.totalorder %s18, 3
      %p69 = por %p67, %p68
      %p70 = scmp.ne.s32.totalorder %s61, %s62
      %p71 = scmp.eq.s32.totalorder %s18, 0
      %p72 = por %p70, %p71
      %p73 = scmp.ne.s32.totalorder %s61, %s62
      %p74 = scmp.eq.s32.totalorder %s19, 3
      %p75 = por %p73, %p74
      %p77 = scmp.ne.s32.totalorder %s62, %s76
      %p78 = scmp.eq.s32.totalorder %s19, 0
      %p79 = por %p77, %p78
      %s81 = sadd.s32 %s80, 1
      %p84 = scmp.eq.s32.totalorder %s13, 3
      %p85 = scmp.ne.s32.totalorder %s80, %s82
      %p86 = scmp.eq.s32.totalorder %s13, 0
      %p87 = por %p85, %p86
      %p88 = scmp.ne.s32.totalorder %s80, %s82
      %p89 = scmp.eq.s32.totalorder %s18, 3
      %p90 = por %p88, %p89
      %p91 = scmp.ne.s32.totalorder %s82, %s83
      %p92 = scmp.eq.s32.totalorder %s18, 0
      %p93 = por %p91, %p92
      %p94 = scmp.ne.s32.totalorder %s82, %s83
      %p95 = scmp.eq.s32.totalorder %s19, 3
      %p96 = por %p94, %p95
      %p98 = scmp.ne.s32.totalorder %s83, %s97
      %p99 = scmp.eq.s32.totalorder %s19, 0
      %p100 = por %p98, %p99
      %s102 = sadd.s32 %s101, 1
      %p105 = scmp.eq.s32.totalorder %s13, 3
      %p106 = scmp.ne.s32.totalorder %s101, %s103
      %p107 = scmp.eq.s32.totalorder %s13, 0
      %p108 = por %p106, %p107
      %p109 = scmp.ne.s32.totalorder %s101, %s103
      %p110 = scmp.eq.s32.totalorder %s18, 3
      %p111 = por %p109, %p110
      %p112 = scmp.ne.s32.totalorder %s103, %s104
      %p113 = scmp.eq.s32.totalorder %s18, 0
      %p114 = por %p112, %p113
      %p115 = scmp.ne.s32.totalorder %s103, %s104
      %p116 = scmp.eq.s32.totalorder %s19, 3
      %p117 = por %p115, %p116
      %p119 = scmp.ne.s32.totalorder %s104, %s118
      %p120 = scmp.eq.s32.totalorder %s19, 0
      %p121 = por %p119, %p120
      %s122 = ssub.s32 %s20, %s32
      %p123 = scmp.eq.s32.totalorder %s122, 0
      %s125 = sadd.s32 %s124, 1
      %s126 = scalar_select %p123, %s124, %s125
      %p129 = pneg %p123
      %p130 = scmp.eq.s32.totalorder %s13, 3
      %p131 = por %p129, %p130
      %p132 = scmp.ne.s32.totalorder %s124, %s127
      %p133 = scmp.eq.s32.totalorder %s13, 0
      %p134 = por %p132, %p133
      %p135 = scmp.ne.s32.totalorder %s124, %s127
      %p136 = scmp.eq.s32.totalorder %s18, 3
      %p137 = por %p135, %p136
      %p138 = scmp.ne.s32.totalorder %s127, %s128
      %p139 = scmp.eq.s32.totalorder %s18, 0
      %p140 = por %p138, %p139
      %p141 = scmp.ne.s32.totalorder %s127, %s128
      %p142 = scmp.eq.s32.totalorder %s19, 3
      %p143 = por %p141, %p142
      %p145 = scmp.ne.s32.totalorder %s128, %s144
      %p146 = scmp.eq.s32.totalorder %s19, 0
      %p147 = por %p145, %p146
      %p148 = scmp.le.s32.totalorder 1, %s13
      %p149 = scmp.lt.s32.totalorder %s13, 5
      %p150 = pnand %p148, %p149
      %p151 = pneg %p150
      // Predicated region
      $region9: #{tpu_custom_call.1} parent=5 // pred_check
        _
      $region10: #{tpu_custom_call.1} parent=5 // pred_check_branch
        %153 = sbr.rel (%p150) target = $region12
      $region11: #{tpu_custom_call.1} parent=5 // pred_region
        %s154 = ssub.s32 %s13, 1
        // Predicated region
        $region13: #{tpu_custom_call.1} parent=11 // pred_check
          %p155 = pneg %p72
        $region14: #{tpu_custom_call.1} parent=11 // pred_check_branch
          %157 = sbr.rel (%p155) target = $region16
        $region15: #{tpu_custom_call.1} parent=11 // pred_region
          _
        $region16: #{tpu_custom_call.1} parent=11 // pred_fallthru
          _
        // Predicated region
        $region17: #{tpu_custom_call.1} parent=11 // pred_check
          %p158 = pneg %p93
        $region18: #{tpu_custom_call.1} parent=11 // pred_check_branch
          %160 = sbr.rel (%p158) target = $region20
        $region19: #{tpu_custom_call.1} parent=11 // pred_region
          _
        $region20: #{tpu_custom_call.1} parent=11 // pred_fallthru
          _
        // Predicated region
        $region21: #{tpu_custom_call.1} parent=11 // pred_check
          %p161 = pneg %p114
        $region22: #{tpu_custom_call.1} parent=11 // pred_check_branch
          %163 = sbr.rel (%p161) target = $region24
        $region23: #{tpu_custom_call.1} parent=11 // pred_region
          _
        $region24: #{tpu_custom_call.1} parent=11 // pred_fallthru
          _
      $region12: #{tpu_custom_call.1} parent=5 // pred_fallthru
        _
      %p164 = scmp.lt.s32.totalorder %s13, 4
      // Predicated region
      $region25: #{tpu_custom_call.1} parent=5 // pred_check
        %p165 = pneg %p164
      $region26: #{tpu_custom_call.1} parent=5 // pred_check_branch
        %167 = sbr.rel (%p165) target = $region28
      $region27: #{tpu_custom_call.1} parent=5 // pred_region
        // Predicated region
        $region29: #{tpu_custom_call.1} parent=27 // pred_check
          %p168 = pneg %p45
        $region30: #{tpu_custom_call.1} parent=27 // pred_check_branch
          %170 = sbr.rel (%p168) target = $region32
        $region31: #{tpu_custom_call.1} parent=27 // pred_region
          %s171 = smul.u32 16, %s20
          %p172 = scmp.lt.s32.totalorder %s171, 31
          %s173 = scalar_select %p172, %s171, 31
          %s174 = smul.addr %s173, 4
          %s175 = scalar_lea.vmem %s0, %s174
          %s176 = smul.u32 16, %s20
        $region32: #{tpu_custom_call.1} parent=27 // pred_fallthru
          _
      $region28: #{tpu_custom_call.1} parent=5 // pred_fallthru
        _
      %p177 = scmp.le.s32.totalorder 1, %s13
      %p178 = scmp.lt.s32.totalorder %s13, 5
      %p179 = pnand %p177, %p178
      %p180 = pneg %p179
      // Predicated region
      $region33: #{tpu_custom_call.1} parent=5 // pred_check
        _
      $region34: #{tpu_custom_call.1} parent=5 // pred_check_branch
        %182 = sbr.rel (%p179) target = $region36
      $region35: #{tpu_custom_call.1} parent=5 // pred_region
        %s183 = ssub.s32 %s13, 1
        %s184 = smul.u32 16, %s22
        %p185 = scmp.lt.s32.totalorder %s184, 31
        %s186 = scalar_select %p185, %s184, 31
        %s187 = smul.addr %s186, 4
        %s188 = scalar_lea.vmem %s0, %s187
        %p189 = pneg %p51
        %p190 = pneg %p48
        %p191 = pneg %p72
        %p192 = pneg %p69
        %p193 = pneg %p93
        %p194 = pneg %p90
        %p195 = pneg %p114
        %p196 = pneg %p111
        %p197 = pneg %p140
        %p198 = pneg %p137
        %s199 = sand.u32 %s127, 1
        %s200 = scalar_lea.sflag [#allocation4], %s199
        %s201 = sand.u32 %s127, 1
        %s202 = smul.addr %s201, 128
        %s203 = scalar_lea.vmem [#allocation3], %s202
        %s204 = smul.u32 16, %s22
        %p205 = scmp.lt.s32.totalorder %s204, 31
        %s206 = scalar_select %p205, %s204, 31
        %s207 = smul.addr %s206, 4
        %s208 = scalar_lea.vmem %s0, %s207
        %s209 = smul.u32 16, %s22
        %s210 = smul.u32 16, %s22
        %p212 = scmp.eq.s32.totalorder %s23, 0
        // Predicated region
        $region37: #{tpu_custom_call.1} parent=35 // pred_check
          %p213 = pneg %p212
        $region38: #{tpu_custom_call.1} parent=35 // pred_check_branch
          %215 = sbr.rel (%p213) target = $region40
        $region39: #{tpu_custom_call.1} parent=35 // pred_region
          %216 = vst [vmem:[%s203] sm:$0xff] 0.0
          %217 = vst [vmem:[%s203 + $0x8] sm:$0xff] 0.0
          %218 = vst [vmem:[%s203 + $0x10] sm:$0xff] 0.0
          %219 = vst [vmem:[%s203 + $0x18] sm:$0xff] 0.0
          %220 = vst [vmem:[%s203 + $0x20] sm:$0xff] 0.0
          %221 = vst [vmem:[%s203 + $0x28] sm:$0xff] 0.0
          %222 = vst [vmem:[%s203 + $0x30] sm:$0xff] 0.0
          %223 = vst [vmem:[%s203 + $0x38] sm:$0xff] 0.0
          %224 = vst [vmem:[%s203 + $0x40] sm:$0xff] 0.0
          %225 = vst [vmem:[%s203 + $0x48] sm:$0xff] 0.0
          %226 = vst [vmem:[%s203 + $0x50] sm:$0xff] 0.0
          %227 = vst [vmem:[%s203 + $0x58] sm:$0xff] 0.0
          %228 = vst [vmem:[%s203 + $0x60] sm:$0xff] 0.0
          %229 = vst [vmem:[%s203 + $0x68] sm:$0xff] 0.0
          %230 = vst [vmem:[%s203 + $0x70] sm:$0xff] 0.0
          %231 = vst [vmem:[%s203 + $0x78] sm:$0xff] 0.0
        $region40: #{tpu_custom_call.1} parent=35 // pred_fallthru
          _
        %s232 = smul.u32 %s23, 128
        %s233 = sshra.s32 %s232, 3
        %s234 = sand.u32 %s232, 7
        %s235 = smul.addr %s233, 4
        %s236 = scalar_lea.vmem %s1, %s235
        %v237 = vld [vmem:[%s236] sm:$0xf]
        %v238 = vld [vmem:[%s236 + $0x4] sm:$0xf]
        %v239 = vld [vmem:[%s236 + $0x8] sm:$0xf]
        %v240 = vld [vmem:[%s236 + $0xc] sm:$0xf]
        %v241 = vld [vmem:[%s236 + $0x10] sm:$0xf]
        %v242 = vld [vmem:[%s236 + $0x14] sm:$0xf]
        %v243 = vld [vmem:[%s236 + $0x18] sm:$0xf]
        %v244 = vld [vmem:[%s236 + $0x1c] sm:$0xf]
        %v245 = vld [vmem:[%s236 + $0x20] sm:$0xf]
        %v246 = vld [vmem:[%s236 + $0x24] sm:$0xf]
        %v247 = vld [vmem:[%s236 + $0x28] sm:$0xf]
        %v248 = vld [vmem:[%s236 + $0x2c] sm:$0xf]
        %v249 = vld [vmem:[%s236 + $0x30] sm:$0xf]
        %v250 = vld [vmem:[%s236 + $0x34] sm:$0xf]
        %v251 = vld [vmem:[%s236 + $0x38] sm:$0xf]
        %v252 = vld [vmem:[%s236 + $0x3c] sm:$0xf]
        %v253 = vld [vmem:[%s208] sm:$0xf]
        %v254 = vld [vmem:[%s208 + $0x4] sm:$0xf]
        %v255 = vld [vmem:[%s208 + $0x8] sm:$0xf]
        %v256 = vld [vmem:[%s208 + $0xc] sm:$0xf]
        %v257 = vld [vmem:[%s208 + $0x10] sm:$0xf]
        %v258 = vld [vmem:[%s208 + $0x14] sm:$0xf]
        %v259 = vld [vmem:[%s208 + $0x18] sm:$0xf]
        %v260 = vld [vmem:[%s208 + $0x1c] sm:$0xf]
        %v261 = vld [vmem:[%s208 + $0x20] sm:$0xf]
        %v262 = vld [vmem:[%s208 + $0x24] sm:$0xf]
        %v263 = vld [vmem:[%s208 + $0x28] sm:$0xf]
        %v264 = vld [vmem:[%s208 + $0x2c] sm:$0xf]
        %v265 = vld [vmem:[%s208 + $0x30] sm:$0xf]
        %v266 = vld [vmem:[%s208 + $0x34] sm:$0xf]
        %v267 = vld [vmem:[%s208 + $0x38] sm:$0xf]
        %v268 = vld [vmem:[%s208 + $0x3c] sm:$0xf]
        %v285 = vunpack.c.l.b16 %v253
        %v286 = vunpack.c.l.b16 %v254
        %v287 = vunpack.c.l.b16 %v255
        %v288 = vunpack.c.l.b16 %v256
        %v289 = vunpack.c.l.b16 %v257
        %v290 = vunpack.c.l.b16 %v258
        %v291 = vunpack.c.l.b16 %v259
        %v292 = vunpack.c.l.b16 %v260
        %v293 = vunpack.c.l.b16 %v261
        %v294 = vunpack.c.l.b16 %v262
        %v295 = vunpack.c.l.b16 %v263
        %v296 = vunpack.c.l.b16 %v264
        %v297 = vunpack.c.l.b16 %v265
        %v298 = vunpack.c.l.b16 %v266
        %v299 = vunpack.c.l.b16 %v267
        %v300 = vunpack.c.l.b16 %v268
        %v301 = vpack.c.b16 %v286, %v285
        %v302 = vpack.c.b16 %v288, %v287
        %v303 = vpack.c.b16 %v290, %v289
        %v304 = vpack.c.b16 %v292, %v291
        %v305 = vpack.c.b16 %v294, %v293
        %v306 = vpack.c.b16 %v296, %v295
        %v307 = vpack.c.b16 %v298, %v297
        %v308 = vpack.c.b16 %v300, %v299
        %v325 = vunpack.c.l.b16 %v237
        %v326 = vunpack.c.l.b16 %v238
        %v327 = vunpack.c.l.b16 %v239
        %v328 = vunpack.c.l.b16 %v240
        %v329 = vunpack.c.l.b16 %v241
        %v330 = vunpack.c.l.b16 %v242
        %v331 = vunpack.c.l.b16 %v243
        %v332 = vunpack.c.l.b16 %v244
        %v333 = vunpack.c.l.b16 %v245
        %v334 = vunpack.c.l.b16 %v246
        %v335 = vunpack.c.l.b16 %v247
        %v336 = vunpack.c.l.b16 %v248
        %v337 = vunpack.c.l.b16 %v249
        %v338 = vunpack.c.l.b16 %v250
        %v339 = vunpack.c.l.b16 %v251
        %v340 = vunpack.c.l.b16 %v252
        %v341 = vpack.c.b16 %v326, %v325
        %v342 = vpack.c.b16 %v328, %v327
        %v343 = vpack.c.b16 %v330, %v329
        %v344 = vpack.c.b16 %v332, %v331
        %v345 = vpack.c.b16 %v334, %v333
        %v346 = vpack.c.b16 %v336, %v335
        %v347 = vpack.c.b16 %v338, %v337
        %v348 = vpack.c.b16 %v340, %v339
        %vm349 = vcmask 523264
        %v351 = vsel %vm349, %v301, 0
        %v354 = vsel %vm349, %v302, 0
        %v357 = vsel %vm349, %v303, 0
        %v360 = vsel %vm349, %v304, 0
        %v363 = vsel %vm349, %v305, 0
        %v366 = vsel %vm349, %v306, 0
        %v369 = vsel %vm349, %v307, 0
        %v372 = vsel %vm349, %v308, 0
        %v375 = vsel %vm349, %v341, 0
        %v378 = vsel %vm349, %v342, 0
        %v381 = vsel %vm349, %v343, 0
        %v384 = vsel %vm349, %v344, 0
        %v387 = vsel %vm349, %v345, 0
        %v390 = vsel %vm349, %v346, 0
        %v393 = vsel %vm349, %v347, 0
        %v396 = vsel %vm349, %v348, 0
        %398 = vmatprep.subr.bf16.mxu0 0
        %399 = vmatpush1.bf16.xpose.msra.mxu0 %v375
        %400 = vmatprep.subr.bf16.mxu0 0
        %401 = vmatpush1.bf16.xpose.msra.mxu0 %v378
        %402 = vmatprep.subr.bf16.mxu0 0
        %403 = vmatpush1.bf16.xpose.msra.mxu0 %v381
        %404 = vmatprep.subr.bf16.mxu0 0
        %405 = vmatpush1.bf16.xpose.msra.mxu0 %v384
        %406 = vmatprep.subr.bf16.mxu0 0
        %407 = vmatpush1.bf16.xpose.msra.mxu0 %v387
        %408 = vmatprep.subr.bf16.mxu0 0
        %409 = vmatpush1.bf16.xpose.msra.mxu0 %v390
        %410 = vmatprep.subr.bf16.mxu0 0
        %411 = vmatpush1.bf16.xpose.msra.mxu0 %v393
        %412 = vmatprep.subr.bf16.mxu0 0
        %413 = vmatpush1.bf16.xpose.msra.mxu0 %v396
        %414 = vmatprep.subr.bf16.mxu0 0
        %415 = vmatpush1.bf16.xpose.msra.mxu0 0
        %416 = vmatprep.subr.bf16.mxu0 0
        %417 = vmatpush1.bf16.xpose.msra.mxu0 0
        %418 = vmatprep.subr.bf16.mxu0 0
        %419 = vmatpush1.bf16.xpose.msra.mxu0 0
        %420 = vmatprep.subr.bf16.mxu0 0
        %421 = vmatpush1.bf16.xpose.msra.mxu0 0
        %422 = vmatprep.subr.bf16.mxu0 0
        %423 = vmatpush1.bf16.xpose.msra.mxu0 0
        %424 = vmatprep.subr.bf16.mxu0 0
        %425 = vmatpush1.bf16.xpose.msra.mxu0 0
        %426 = vmatprep.subr.bf16.mxu0 0
        %427 = vmatpush1.bf16.xpose.msra.mxu0 0
        %428 = vmatprep.subr.bf16.mxu0 0
        %429 = vmatpush1.bf16.xpose.msra.mxu0 0
        %430 = vmatprep.mubr.bf16.mxu0 0
        %431 = vmatmul.mubr.bf16.gmra.mrb[0].mxu0 %v351
        %v432 = vpop.f32.mrb[0].mxu0
        %v433 = vadd.f32 0.0, %v432
        %v434 = vpop.f32.mrb[0].mxu0
        %v435 = vpop.f32.mrb[0].mxu0
        %v436 = vadd.f32 0.0, %v435
        %v437 = vpop.f32.mrb[0].mxu0
        %438 = vmatprep.mubr.bf16.mxu0 0
        %439 = vmatmul.mubr.bf16.gmra.mrb[0].mxu0 %v354
        %v440 = vpop.f32.mrb[0].mxu0
        %v441 = vadd.f32 0.0, %v440
        %v442 = vpop.f32.mrb[0].mxu0
        %v443 = vpop.f32.mrb[0].mxu0
        %v444 = vadd.f32 0.0, %v443
        %v445 = vpop.f32.mrb[0].mxu0
        %446 = vmatprep.mubr.bf16.mxu0 0
        %447 = vmatmul.mubr.bf16.gmra.mrb[0].mxu0 %v357
        %v448 = vpop.f32.mrb[0].mxu0
        %v449 = vadd.f32 0.0, %v448
        %v450 = vpop.f32.mrb[0].mxu0
        %v451 = vpop.f32.mrb[0].mxu0
        %v452 = vadd.f32 0.0, %v451
        %v453 = vpop.f32.mrb[0].mxu0
        %454 = vmatprep.mubr.bf16.mxu0 0
        %455 = vmatmul.mubr.bf16.gmra.mrb[0].mxu0 %v360
        %v456 = vpop.f32.mrb[0].mxu0
        %v457 = vadd.f32 0.0, %v456
        %v458 = vpop.f32.mrb[0].mxu0
        %v459 = vpop.f32.mrb[0].mxu0
        %v460 = vadd.f32 0.0, %v459
        %v461 = vpop.f32.mrb[0].mxu0
        %462 = vmatprep.mubr.bf16.mxu0 0
        %463 = vmatmul.mubr.bf16.gmra.mrb[0].mxu0 %v363
        %v464 = vpop.f32.mrb[0].mxu0
        %v465 = vadd.f32 0.0, %v464
        %v466 = vpop.f32.mrb[0].mxu0
        %v467 = vpop.f32.mrb[0].mxu0
        %v468 = vadd.f32 0.0, %v467
        %v469 = vpop.f32.mrb[0].mxu0
        %470 = vmatprep.mubr.bf16.mxu0 0
        %471 = vmatmul.mubr.bf16.gmra.mrb[0].mxu0 %v366
        %v472 = vpop.f32.mrb[0].mxu0
        %v473 = vadd.f32 0.0, %v472
        %v474 = vpop.f32.mrb[0].mxu0
        %v475 = vpop.f32.mrb[0].mxu0
        %v476 = vadd.f32 0.0, %v475
        %v477 = vpop.f32.mrb[0].mxu0
        %478 = vmatprep.mubr.bf16.mxu0 0
        %479 = vmatmul.mubr.bf16.gmra.mrb[0].mxu0 %v369
        %v480 = vpop.f32.mrb[0].mxu0
        %v481 = vadd.f32 0.0, %v480
        %v482 = vpop.f32.mrb[0].mxu0
        %v483 = vpop.f32.mrb[0].mxu0
        %v484 = vadd.f32 0.0, %v483
        %v485 = vpop.f32.mrb[0].mxu0
        %486 = vmatprep.mubr.bf16.mxu0 0
        %487 = vmatmul.mubr.bf16.gmra.mrb[0].mxu0 %v372
        %v488 = vpop.f32.mrb[0].mxu0
        %v489 = vadd.f32 0.0, %v488
        %v490 = vpop.f32.mrb[0].mxu0
        %v491 = vpop.f32.mrb[0].mxu0
        %v492 = vadd.f32 0.0, %v491
        %v493 = vpop.f32.mrb[0].mxu0
        %494 = vdwg.mxu0
        %p495 = scmp.eq.s32.totalorder %s22, %s23
        // Predicated region
        $region41: #{tpu_custom_call.1} parent=35 // pred_check
          %p496 = pneg %p495
        $region42: #{tpu_custom_call.1} parent=35 // pred_check_branch
          %498 = sbr.rel (%p496) target = $region44
        $region43: #{tpu_custom_call.1} parent=35 // pred_region
          %v499 = vlaneseq
          %v500 = vshrl.u32 %v499, 7
          %v501 = vadd.s32 %v500, 8
          %v502 = vadd.s32 %v500, 16
          %v503 = vadd.s32 %v500, 24
          %v504 = vadd.s32 %v500, 32
          %v505 = vadd.s32 %v500, 40
          %v506 = vadd.s32 %v500, 48
          %v507 = vadd.s32 %v500, 56
          %v508 = vadd.s32 %v500, 64
          %v509 = vadd.s32 %v500, 72
          %v510 = vadd.s32 %v500, 80
          %v511 = vadd.s32 %v500, 88
          %v512 = vadd.s32 %v500, 96
          %v513 = vadd.s32 %v500, 104
          %v514 = vadd.s32 %v500, 112
          %v515 = vadd.s32 %v500, 120
          %s516 = smul.u32 %s22, 128
          %v517 = vstv %s516
          %v518 = vadd.s32 %v500, %v517
          %v519 = vadd.s32 %v501, %v517
          %v520 = vadd.s32 %v502, %v517
          %v521 = vadd.s32 %v503, %v517
          %v522 = vadd.s32 %v504, %v517
          %v523 = vadd.s32 %v505, %v517
          %v524 = vadd.s32 %v506, %v517
          %v525 = vadd.s32 %v507, %v517
          %v526 = vadd.s32 %v508, %v517
          %v527 = vadd.s32 %v509, %v517
          %v528 = vadd.s32 %v510, %v517
          %v529 = vadd.s32 %v511, %v517
          %v530 = vadd.s32 %v512, %v517
          %v531 = vadd.s32 %v513, %v517
          %v532 = vadd.s32 %v514, %v517
          %v533 = vadd.s32 %v515, %v517
          %v534 = vlaneseq
          %v535 = vand.u32 %v534, 127
          %v536 = vstv %s232
          %v537 = vadd.s32 %v535, %v536
          %vm538 = vcmp.eq.s32.totalorder %v518, %v537
          %vm539 = vcmp.eq.s32.totalorder %v519, %v537
          %vm540 = vcmp.eq.s32.totalorder %v520, %v537
          %vm541 = vcmp.eq.s32.totalorder %v521, %v537
          %vm542 = vcmp.eq.s32.totalorder %v522, %v537
          %vm543 = vcmp.eq.s32.totalorder %v523, %v537
          %vm544 = vcmp.eq.s32.totalorder %v524, %v537
          %vm545 = vcmp.eq.s32.totalorder %v525, %v537
          %vm546 = vcmp.eq.s32.totalorder %v526, %v537
          %vm547 = vcmp.eq.s32.totalorder %v527, %v537
          %vm548 = vcmp.eq.s32.totalorder %v528, %v537
          %vm549 = vcmp.eq.s32.totalorder %v529, %v537
          %vm550 = vcmp.eq.s32.totalorder %v530, %v537
          %vm551 = vcmp.eq.s32.totalorder %v531, %v537
          %vm552 = vcmp.eq.s32.totalorder %v532, %v537
          %vm553 = vcmp.eq.s32.totalorder %v533, %v537
          %v554 = vsel %vm538, -1e+30, %v433
          %v555 = vsel %vm539, -1e+30, %v436
          %v556 = vsel %vm540, -1e+30, %v441
          %v557 = vsel %vm541, -1e+30, %v444
          %v558 = vsel %vm542, -1e+30, %v449
          %v559 = vsel %vm543, -1e+30, %v452
          %v560 = vsel %vm544, -1e+30, %v457
          %v561 = vsel %vm545, -1e+30, %v460
          %v562 = vsel %vm546, -1e+30, %v465
          %v563 = vsel %vm547, -1e+30, %v468
          %v564 = vsel %vm548, -1e+30, %v473
          %v565 = vsel %vm549, -1e+30, %v476
          %v566 = vsel %vm550, -1e+30, %v481
          %v567 = vsel %vm551, -1e+30, %v484
          %v568 = vsel %vm552, -1e+30, %v489
          %v569 = vsel %vm553, -1e+30, %v492
          %570 = vst [vmem:[#allocation2] sm:$0xff] %v554
          %571 = vst [vmem:[#allocation2 + $0x8] sm:$0xff] %v555
          %572 = vst [vmem:[#allocation2 + $0x10] sm:$0xff] %v556
          %573 = vst [vmem:[#allocation2 + $0x18] sm:$0xff] %v557
          %574 = vst [vmem:[#allocation2 + $0x20] sm:$0xff] %v558
          %575 = vst [vmem:[#allocation2 + $0x28] sm:$0xff] %v559
          %576 = vst [vmem:[#allocation2 + $0x30] sm:$0xff] %v560
          %577 = vst [vmem:[#allocation2 + $0x38] sm:$0xff] %v561
          %578 = vst [vmem:[#allocation2 + $0x40] sm:$0xff] %v562
          %579 = vst [vmem:[#allocation2 + $0x48] sm:$0xff] %v563
          %580 = vst [vmem:[#allocation2 + $0x50] sm:$0xff] %v564
          %581 = vst [vmem:[#allocation2 + $0x58] sm:$0xff] %v565
          %582 = vst [vmem:[#allocation2 + $0x60] sm:$0xff] %v566
          %583 = vst [vmem:[#allocation2 + $0x68] sm:$0xff] %v567
          %584 = vst [vmem:[#allocation2 + $0x70] sm:$0xff] %v568
          %585 = vst [vmem:[#allocation2 + $0x78] sm:$0xff] %v569
        $region44: #{tpu_custom_call.1} parent=35 // pred_fallthru
          _
        %p586 = scmp.ne.s32.totalorder %s22, %s23
        // Predicated region
        $region45: #{tpu_custom_call.1} parent=35 // pred_check
          %p587 = pneg %p586
        $region46: #{tpu_custom_call.1} parent=35 // pred_check_branch
          %589 = sbr.rel (%p587) target = $region48
        $region47: #{tpu_custom_call.1} parent=35 // pred_region
          %590 = vst [vmem:[#allocation2] sm:$0xff] %v433
          %591 = vst [vmem:[#allocation2 + $0x8] sm:$0xff] %v436
          %592 = vst [vmem:[#allocation2 + $0x10] sm:$0xff] %v441
          %593 = vst [vmem:[#allocation2 + $0x18] sm:$0xff] %v444
          %594 = vst [vmem:[#allocation2 + $0x20] sm:$0xff] %v449
          %595 = vst [vmem:[#allocation2 + $0x28] sm:$0xff] %v452
          %596 = vst [vmem:[#allocation2 + $0x30] sm:$0xff] %v457
          %597 = vst [vmem:[#allocation2 + $0x38] sm:$0xff] %v460
          %598 = vst [vmem:[#allocation2 + $0x40] sm:$0xff] %v465
          %599 = vst [vmem:[#allocation2 + $0x48] sm:$0xff] %v468
          %600 = vst [vmem:[#allocation2 + $0x50] sm:$0xff] %v473
          %601 = vst [vmem:[#allocation2 + $0x58] sm:$0xff] %v476
          %602 = vst [vmem:[#allocation2 + $0x60] sm:$0xff] %v481
          %603 = vst [vmem:[#allocation2 + $0x68] sm:$0xff] %v484
          %604 = vst [vmem:[#allocation2 + $0x70] sm:$0xff] %v489
          %605 = vst [vmem:[#allocation2 + $0x78] sm:$0xff] %v492
        $region48: #{tpu_custom_call.1} parent=35 // pred_fallthru
          _
        %v606 = vld [vmem:[#allocation2] sm:$0xff]
        %v607 = vld [vmem:[#allocation2 + $0x8] sm:$0xff]
        %v608 = vld [vmem:[#allocation2 + $0x10] sm:$0xff]
        %v609 = vld [vmem:[#allocation2 + $0x18] sm:$0xff]
        %v610 = vld [vmem:[#allocation2 + $0x20] sm:$0xff]
        %v611 = vld [vmem:[#allocation2 + $0x28] sm:$0xff]
        %v612 = vld [vmem:[#allocation2 + $0x30] sm:$0xff]
        %v613 = vld [vmem:[#allocation2 + $0x38] sm:$0xff]
        %v614 = vld [vmem:[#allocation2 + $0x40] sm:$0xff]
        %v615 = vld [vmem:[#allocation2 + $0x48] sm:$0xff]
        %v616 = vld [vmem:[#allocation2 + $0x50] sm:$0xff]
        %v617 = vld [vmem:[#allocation2 + $0x58] sm:$0xff]
        %v618 = vld [vmem:[#allocation2 + $0x60] sm:$0xff]
        %v619 = vld [vmem:[#allocation2 + $0x68] sm:$0xff]
        %v620 = vld [vmem:[#allocation2 + $0x70] sm:$0xff]
        %v621 = vld [vmem:[#allocation2 + $0x78] sm:$0xff]
        %s622 = smul.u32 %s22, 128
        %s623 = scalar_lea.vmem %s2, %s622
        %v624 = vld [vmem:[%s623] sm:$0xff]
        %v625 = vld [vmem:[%s623 + $0x8] sm:$0xff]
        %v626 = vld [vmem:[%s623 + $0x10] sm:$0xff]
        %v627 = vld [vmem:[%s623 + $0x18] sm:$0xff]
        %v628 = vld [vmem:[%s623 + $0x20] sm:$0xff]
        %v629 = vld [vmem:[%s623 + $0x28] sm:$0xff]
        %v630 = vld [vmem:[%s623 + $0x30] sm:$0xff]
        %v631 = vld [vmem:[%s623 + $0x38] sm:$0xff]
        %v632 = vld [vmem:[%s623 + $0x40] sm:$0xff]
        %v633 = vld [vmem:[%s623 + $0x48] sm:$0xff]
        %v634 = vld [vmem:[%s623 + $0x50] sm:$0xff]
        %v635 = vld [vmem:[%s623 + $0x58] sm:$0xff]
        %v636 = vld [vmem:[%s623 + $0x60] sm:$0xff]
        %v637 = vld [vmem:[%s623 + $0x68] sm:$0xff]
        %v638 = vld [vmem:[%s623 + $0x70] sm:$0xff]
        %v639 = vld [vmem:[%s623 + $0x78] sm:$0xff]
        %s640 = sshra.s32 %s232, 7
        %s641 = sand.u32 %s232, 127
        %s642 = scalar_lea.vmem %s3, %s640
        %v643 = vld [vmem:[%s642] sm:$0x1]
        %645 = vset.pattern.permute.xlu0 0
        %646 = vperm.xlu0 %645, %v624
        %v647 = vpop.permute.xlu0 %646
        %650 = vset.pattern.permute.xlu0 0
        %651 = vperm.xlu0 %650, %v625
        %v652 = vpop.permute.xlu0 %651
        %655 = vset.pattern.permute.xlu0 0
        %656 = vperm.xlu0 %655, %v626
        %v657 = vpop.permute.xlu0 %656
        %660 = vset.pattern.permute.xlu0 0
        %661 = vperm.xlu0 %660, %v627
        %v662 = vpop.permute.xlu0 %661
        %665 = vset.pattern.permute.xlu0 0
        %666 = vperm.xlu0 %665, %v628
        %v667 = vpop.permute.xlu0 %666
        %670 = vset.pattern.permute.xlu0 0
        %671 = vperm.xlu0 %670, %v629
        %v672 = vpop.permute.xlu0 %671
        %675 = vset.pattern.permute.xlu0 0
        %676 = vperm.xlu0 %675, %v630
        %v677 = vpop.permute.xlu0 %676
        %680 = vset.pattern.permute.xlu0 0
        %681 = vperm.xlu0 %680, %v631
        %v682 = vpop.permute.xlu0 %681
        %685 = vset.pattern.permute.xlu0 0
        %686 = vperm.xlu0 %685, %v632
        %v687 = vpop.permute.xlu0 %686
        %690 = vset.pattern.permute.xlu0 0
        %691 = vperm.xlu0 %690, %v633
        %v692 = vpop.permute.xlu0 %691
        %695 = vset.pattern.permute.xlu0 0
        %696 = vperm.xlu0 %695, %v634
        %v697 = vpop.permute.xlu0 %696
        %700 = vset.pattern.permute.xlu0 0
        %701 = vperm.xlu0 %700, %v635
        %v702 = vpop.permute.xlu0 %701
        %705 = vset.pattern.permute.xlu0 0
        %706 = vperm.xlu0 %705, %v636
        %v707 = vpop.permute.xlu0 %706
        %710 = vset.pattern.permute.xlu0 0
        %711 = vperm.xlu0 %710, %v637
        %v712 = vpop.permute.xlu0 %711
        %715 = vset.pattern.permute.xlu0 0
        %716 = vperm.xlu0 %715, %v638
        %v717 = vpop.permute.xlu0 %716
        %720 = vset.pattern.permute.xlu0 0
        %721 = vperm.xlu0 %720, %v639
        %v722 = vpop.permute.xlu0 %721
        %v724 = vsub.f32 %v606, %v647
        %v725 = vsub.f32 %v607, %v652
        %v726 = vsub.f32 %v608, %v657
        %v727 = vsub.f32 %v609, %v662
        %v728 = vsub.f32 %v610, %v667
        %v729 = vsub.f32 %v611, %v672
        %v730 = vsub.f32 %v612, %v677
        %v731 = vsub.f32 %v613, %v682
        %v732 = vsub.f32 %v614, %v687
        %v733 = vsub.f32 %v615, %v692
        %v734 = vsub.f32 %v616, %v697
        %v735 = vsub.f32 %v617, %v702
        %v736 = vsub.f32 %v618, %v707
        %v737 = vsub.f32 %v619, %v712
        %v738 = vsub.f32 %v620, %v717
        %v739 = vsub.f32 %v621, %v722
        %v740 = vmax.f32 %v724, 0.0
        %v741 = vmax.f32 %v725, 0.0
        %v742 = vmax.f32 %v726, 0.0
        %v743 = vmax.f32 %v727, 0.0
        %v744 = vmax.f32 %v728, 0.0
        %v745 = vmax.f32 %v729, 0.0
        %v746 = vmax.f32 %v730, 0.0
        %v747 = vmax.f32 %v731, 0.0
        %v748 = vmax.f32 %v732, 0.0
        %v749 = vmax.f32 %v733, 0.0
        %v750 = vmax.f32 %v734, 0.0
        %v751 = vmax.f32 %v735, 0.0
        %v752 = vmax.f32 %v736, 0.0
        %v753 = vmax.f32 %v737, 0.0
        %v754 = vmax.f32 %v738, 0.0
        %v755 = vmax.f32 %v739, 0.0
        %v757 = vlaneseq
        %v758 = vshrl.u32 %v757, 7
        %v759 = vsub.s32 0, %v758
        %v760 = vrot.slane %v643, %v759
        %v762 = vsub.f32 %v606, %v760
        %v763 = vsub.f32 %v607, %v760
        %v764 = vsub.f32 %v608, %v760
        %v765 = vsub.f32 %v609, %v760
        %v766 = vsub.f32 %v610, %v760
        %v767 = vsub.f32 %v611, %v760
        %v768 = vsub.f32 %v612, %v760
        %v769 = vsub.f32 %v613, %v760
        %v770 = vsub.f32 %v614, %v760
        %v771 = vsub.f32 %v615, %v760
        %v772 = vsub.f32 %v616, %v760
        %v773 = vsub.f32 %v617, %v760
        %v774 = vsub.f32 %v618, %v760
        %v775 = vsub.f32 %v619, %v760
        %v776 = vsub.f32 %v620, %v760
        %v777 = vsub.f32 %v621, %v760
        %v778 = vmax.f32 %v762, 0.0
        %v779 = vmax.f32 %v763, 0.0
        %v780 = vmax.f32 %v764, 0.0
        %v781 = vmax.f32 %v765, 0.0
        %v782 = vmax.f32 %v766, 0.0
        %v783 = vmax.f32 %v767, 0.0
        %v784 = vmax.f32 %v768, 0.0
        %v785 = vmax.f32 %v769, 0.0
        %v786 = vmax.f32 %v770, 0.0
        %v787 = vmax.f32 %v771, 0.0
        %v788 = vmax.f32 %v772, 0.0
        %v789 = vmax.f32 %v773, 0.0
        %v790 = vmax.f32 %v774, 0.0
        %v791 = vmax.f32 %v775, 0.0
        %v792 = vmax.f32 %v776, 0.0
        %v793 = vmax.f32 %v777, 0.0
        %v794 = vadd.f32 %v740, %v778
        %v795 = vadd.f32 %v741, %v779
        %v796 = vadd.f32 %v742, %v780
        %v797 = vadd.f32 %v743, %v781
        %v798 = vadd.f32 %v744, %v782
        %v799 = vadd.f32 %v745, %v783
        %v800 = vadd.f32 %v746, %v784
        %v801 = vadd.f32 %v747, %v785
        %v802 = vadd.f32 %v748, %v786
        %v803 = vadd.f32 %v749, %v787
        %v804 = vadd.f32 %v750, %v788
        %v805 = vadd.f32 %v751, %v789
        %v806 = vadd.f32 %v752, %v790
        %v807 = vadd.f32 %v753, %v791
        %v808 = vadd.f32 %v754, %v792
        %v809 = vadd.f32 %v755, %v793
        %810 = vadd.xlane.f32.xlu0 %v794
        %v811 = vpop.xlane.xlu0 %810
        %812 = vadd.xlane.f32.xlu0 %v795
        %v813 = vpop.xlane.xlu0 %812
        %814 = vadd.xlane.f32.xlu0 %v796
        %v815 = vpop.xlane.xlu0 %814
        %816 = vadd.xlane.f32.xlu0 %v797
        %v817 = vpop.xlane.xlu0 %816
        %818 = vadd.xlane.f32.xlu0 %v798
        %v819 = vpop.xlane.xlu0 %818
        %820 = vadd.xlane.f32.xlu0 %v799
        %v821 = vpop.xlane.xlu0 %820
        %822 = vadd.xlane.f32.xlu0 %v800
        %v823 = vpop.xlane.xlu0 %822
        %824 = vadd.xlane.f32.xlu0 %v801
        %v825 = vpop.xlane.xlu0 %824
        %826 = vadd.xlane.f32.xlu0 %v802
        %v827 = vpop.xlane.xlu0 %826
        %828 = vadd.xlane.f32.xlu0 %v803
        %v829 = vpop.xlane.xlu0 %828
        %830 = vadd.xlane.f32.xlu0 %v804
        %v831 = vpop.xlane.xlu0 %830
        %832 = vadd.xlane.f32.xlu0 %v805
        %v833 = vpop.xlane.xlu0 %832
        %834 = vadd.xlane.f32.xlu0 %v806
        %v835 = vpop.xlane.xlu0 %834
        %836 = vadd.xlane.f32.xlu0 %v807
        %v837 = vpop.xlane.xlu0 %836
        %838 = vadd.xlane.f32.xlu0 %v808
        %v839 = vpop.xlane.xlu0 %838
        %840 = vadd.xlane.f32.xlu0 %v809
        %v841 = vpop.xlane.xlu0 %840
        %v842 = vld [vmem:[%s203] sm:$0xff]
        %v843 = vld [vmem:[%s203 + $0x8] sm:$0xff]
        %v844 = vld [vmem:[%s203 + $0x10] sm:$0xff]
        %v845 = vld [vmem:[%s203 + $0x18] sm:$0xff]
        %v846 = vld [vmem:[%s203 + $0x20] sm:$0xff]
        %v847 = vld [vmem:[%s203 + $0x28] sm:$0xff]
        %v848 = vld [vmem:[%s203 + $0x30] sm:$0xff]
        %v849 = vld [vmem:[%s203 + $0x38] sm:$0xff]
        %v850 = vld [vmem:[%s203 + $0x40] sm:$0xff]
        %v851 = vld [vmem:[%s203 + $0x48] sm:$0xff]
        %v852 = vld [vmem:[%s203 + $0x50] sm:$0xff]
        %v853 = vld [vmem:[%s203 + $0x58] sm:$0xff]
        %v854 = vld [vmem:[%s203 + $0x60] sm:$0xff]
        %v855 = vld [vmem:[%s203 + $0x68] sm:$0xff]
        %v856 = vld [vmem:[%s203 + $0x70] sm:$0xff]
        %v857 = vld [vmem:[%s203 + $0x78] sm:$0xff]
        %v858 = vadd.f32 %v842, %v811
        %v859 = vadd.f32 %v843, %v813
        %v860 = vadd.f32 %v844, %v815
        %v861 = vadd.f32 %v845, %v817
        %v862 = vadd.f32 %v846, %v819
        %v863 = vadd.f32 %v847, %v821
        %v864 = vadd.f32 %v848, %v823
        %v865 = vadd.f32 %v849, %v825
        %v866 = vadd.f32 %v850, %v827
        %v867 = vadd.f32 %v851, %v829
        %v868 = vadd.f32 %v852, %v831
        %v869 = vadd.f32 %v853, %v833
        %v870 = vadd.f32 %v854, %v835
        %v871 = vadd.f32 %v855, %v837
        %v872 = vadd.f32 %v856, %v839
        %v873 = vadd.f32 %v857, %v841
        %874 = vst [vmem:[%s203] sm:$0xff] %v858
        %875 = vst [vmem:[%s203 + $0x8] sm:$0xff] %v859
        %876 = vst [vmem:[%s203 + $0x10] sm:$0xff] %v860
        %877 = vst [vmem:[%s203 + $0x18] sm:$0xff] %v861
        %878 = vst [vmem:[%s203 + $0x20] sm:$0xff] %v862
        %879 = vst [vmem:[%s203 + $0x28] sm:$0xff] %v863
        %880 = vst [vmem:[%s203 + $0x30] sm:$0xff] %v864
        %881 = vst [vmem:[%s203 + $0x38] sm:$0xff] %v865
        %882 = vst [vmem:[%s203 + $0x40] sm:$0xff] %v866
        %883 = vst [vmem:[%s203 + $0x48] sm:$0xff] %v867
        %884 = vst [vmem:[%s203 + $0x50] sm:$0xff] %v868
        %885 = vst [vmem:[%s203 + $0x58] sm:$0xff] %v869
        %886 = vst [vmem:[%s203 + $0x60] sm:$0xff] %v870
        %887 = vst [vmem:[%s203 + $0x68] sm:$0xff] %v871
        %888 = vst [vmem:[%s203 + $0x70] sm:$0xff] %v872
        %889 = vst [vmem:[%s203 + $0x78] sm:$0xff] %v873
        %s890 = sand.u32 %s127, 1
        %s891 = scalar_lea.sflag [#allocation4], %s890
        %s892 = sand.u32 %s127, 1
        %s893 = smul.addr %s892, 128
        %s894 = scalar_lea.vmem [#allocation3], %s893
        // Predicated region
        $region49: #{tpu_custom_call.1} parent=35 // pred_check
          %p895 = pneg %p137
        $region50: #{tpu_custom_call.1} parent=35 // pred_check_branch
          %897 = sbr.rel (%p895) target = $region52
        $region51: #{tpu_custom_call.1} parent=35 // pred_region
          %s898 = smul.u32 16, %s22
          %s900 = ssub.s32 2048, 2048
          %901 = vsyncadd %s891, %s900
          %s902 = smul.addr %s898, 128
          %s903 = scalar_lea.hbm %s4, %s902
          %s904 = sshll.u32 %s894, 4
          %s905 = int_to_ptr.vmem [resolvable:$true] %s904
          %910 = dma.vmem_to_hbm [thread:$0]  %s905, 2048, %s903, %s891, 128, 128, 8
        $region52: #{tpu_custom_call.1} parent=35 // pred_fallthru
          _
      $region36: #{tpu_custom_call.1} parent=5 // pred_fallthru
        _
      %p911 = scmp.le.s32.totalorder 2, %s13
      // Predicated region
      $region53: #{tpu_custom_call.1} parent=5 // pred_check
        %p912 = pneg %p911
      $region54: #{tpu_custom_call.1} parent=5 // pred_check_branch
        %914 = sbr.rel (%p912) target = $region56
      $region55: #{tpu_custom_call.1} parent=5 // pred_region
        %s915 = ssub.s32 %s13, 2
        // Predicated region
        $region57: #{tpu_custom_call.1} parent=55 // pred_check
          %p916 = pneg %p143
        $region58: #{tpu_custom_call.1} parent=55 // pred_check_branch
          %918 = sbr.rel (%p916) target = $region60
        $region59: #{tpu_custom_call.1} parent=55 // pred_region
          %s919 = sand.u32 %s128, 1
          %s920 = scalar_lea.sflag [#allocation4], %s919
          %s921 = sand.u32 %s128, 1
          %s922 = smul.addr %s921, 128
          %s923 = scalar_lea.vmem [#allocation3], %s922
          %924 = dma.done %s920, 2048
        $region60: #{tpu_custom_call.1} parent=55 // pred_fallthru
          _
      $region56: #{tpu_custom_call.1} parent=5 // pred_fallthru
        _
    $region6: #{tpu_custom_call.1} parent=1 // loop_footer
      %s17 = sadd.s32 1, %s13
    $region7: #{tpu_custom_call.1} parent=1 // loop_footer_branch
      %12 = sbr.rel target = $region3
    $region8: #{tpu_custom_call.1} parent=1 // loop_exit
      _
    %925 = vsyncpa [#allocation4], 1
    %s926 = scalar_lea.sflag [#allocation4], 1
    %927 = vsyncpa %s926, 1

</llo_original>
